<compile_context>
chip_gen: v7x
topology: tpu7x:2x2x1
jax: 0.10.0
libtpu: 0.0.40
codegen_flags: <defaults>
</compile_context>

<pallas_src>
import functools
import math

import jax
import jax.numpy as jnp
from jax.experimental import pallas as pl
from jax.experimental.pallas import tpu as pltpu

MASK_FILL = -10000000.0


def _alignment_kernel(a_ref, b_ref, ma_ref, mb_ref, fa_ref, fb_ref, *, temperature):
    a = a_ref[...]        # (Bt, La, H)  streaming dtype (f32 or bf16)
    b = b_ref[...]        # (Bt, Lb, H)
    ma = ma_ref[...]      # (Bt, La, 1)  f32
    mb = mb_ref[...]      # (Bt, 1, Lb)  f32 (pre-transposed in the wrapper)

    # attn = (a @ b^T) * temperature, transpose-free (contract last axes), with
    # the scalar folded into the smaller (La, H) operand; f32 MXU accumulation.
    attn = jnp.einsum(
        "bik,bjk->bij", a * jnp.asarray(temperature, a.dtype), b,
        preferred_element_type=jnp.float32)                       # (Bt, La, Lb) f32

    # masked_fill(~(mask_a @ mask_b^T).bool(), -1e7): fill where either side is 0.
    # Select (not additive bias) keeps the reference's exact semantics so
    # fully-masked rows/columns stay uniform under softmax.
    valid = (ma != 0.0) & (mb != 0.0)                              # -> (Bt, La, Lb)
    attn = jnp.where(valid, attn, MASK_FILL)

    # softmax over La (torch dim=1); exact normalization — denominators are tiny.
    e_a = jnp.exp(attn - jnp.max(attn, axis=1, keepdims=True))
    attn_a = e_a / jnp.sum(e_a, axis=1, keepdims=True)
    # softmax over Lb (torch dim=2)
    e_b = jnp.exp(attn - jnp.max(attn, axis=2, keepdims=True))
    attn_b = e_b / jnp.sum(e_b, axis=2, keepdims=True)

    # feature_b = attn_a^T @ a ; feature_a = attn_b @ b (transpose-free
    # contractions). Probabilities cast back to the streaming dtype so the MXU
    # runs at native bf16 rate when inputs are bf16.
    feature_b = jnp.einsum("bij,bik->bjk", attn_a.astype(a.dtype), a,
                           preferred_element_type=jnp.float32)     # (Bt, Lb, H)
    feature_a = jnp.einsum("bij,bjk->bik", attn_b.astype(b.dtype), b,
                           preferred_element_type=jnp.float32)     # (Bt, La, H)

    fa_ref[...] = feature_a.astype(fa_ref.dtype)
    fb_ref[...] = feature_b.astype(fb_ref.dtype)


def _vmem_capacity_bytes():
    """Per-core VMEM capacity; conservative fallback if the query is unavailable."""
    try:
        cap = getattr(pltpu.get_tpu_info(), "vmem_capacity_bytes", None)
        if cap:
            return int(cap)
    except Exception:
        pass
    return 64 * 2**20   # v7x per-TensorCore size (most restrictive generation)


def _per_element_bytes(La, Lb, H, elem_bytes):
    """Rough per-batch-element VMEM working set for one grid step (bytes)."""
    io = 4 * (La + Lb) * H * elem_bytes            # a, b, fa, fb (double-buffered)
    masks = 4 * (La * 128 + 8 * max(Lb, 128))      # padded f32 mask blocks in VMEM
    temps = 6 * La * Lb * 4                        # attn + exp/softmax f32 temporaries
    return io + masks + temps


def _pick_batch_block(B, La, Lb, H, elem_bytes, budget_bytes):
    """Largest batch block whose per-step working set stays under budget_bytes."""
    per_elem = max(_per_element_bytes(La, Lb, H, elem_bytes), 1)
    bt = int(max(1, min(B, budget_bytes // per_elem)))
    # Keep >= 2 grid steps so the "parallel" batch axis shards across v7x's two
    # TensorCores (an extra ~0.35us step on single-TC v5e/v6e is negligible).
    if B > 1:
        bt = min(bt, pl.cdiv(B, 2))
    return bt


def alignment_forward(a, b, mask_a, mask_b, temperature):
    """Pallas implementation of Alignment.forward. Returns (feature_a, feature_b)."""
    B, La, H = a.shape
    _, Lb, _ = b.shape
    out_dtype = a.dtype                       # keep bf16 as bf16 (no f32 up-cast)
    elem_bytes = jnp.dtype(out_dtype).itemsize

    mask_a = mask_a.astype(jnp.float32).reshape(B, La, 1)
    # (B, Lb, 1) -> (B, 1, Lb): metadata-only reshape, avoids an in-kernel transpose.
    mask_b_t = mask_b.astype(jnp.float32).reshape(B, 1, Lb)

    vmem_cap = _vmem_capacity_bytes()
    bt = _pick_batch_block(B, La, Lb, H, elem_bytes,
                           budget_bytes=int(0.25 * vmem_cap))

    grid_b = pl.cdiv(B, bt)
    Bp = grid_b * bt
    if Bp != B:                               # zero-pad ragged batch tail
        pad = Bp - B
        a = jnp.pad(a, ((0, pad), (0, 0), (0, 0)))
        b = jnp.pad(b, ((0, pad), (0, 0), (0, 0)))
        mask_a = jnp.pad(mask_a, ((0, pad), (0, 0), (0, 0)))
        mask_b_t = jnp.pad(mask_b_t, ((0, pad), (0, 0), (0, 0)))

    # Scoped-VMEM request: double-buffered blocks + temporaries, capped with
    # headroom (~80% of physical per-core VMEM) so the pipeline stays overlapped.
    step_bytes = bt * _per_element_bytes(La, Lb, H, elem_bytes)
    vmem_limit = int(min(max(3 * step_bytes, 32 * 2**20), int(0.8 * vmem_cap)))

    kernel = functools.partial(_alignment_kernel, temperature=float(temperature))

    # NOTE: default pipeline depth (2) kept; raise via pipeline_mode=pl.Buffered(3)
    # on a/b only if profiling shows exposed DMA at tiny per-step compute.
    fa, fb = pl.pallas_call(
        kernel,
        out_shape=(
            jax.ShapeDtypeStruct((Bp, La, H), out_dtype),
            jax.ShapeDtypeStruct((Bp, Lb, H), out_dtype),
        ),
        grid=(grid_b,),
        in_specs=[
            pl.BlockSpec((bt, La, H), lambda i: (i, 0, 0)),   # a
            pl.BlockSpec((bt, Lb, H), lambda i: (i, 0, 0)),   # b
            pl.BlockSpec((bt, La, 1), lambda i: (i, 0, 0)),   # mask_a
            pl.BlockSpec((bt, 1, Lb), lambda i: (i, 0, 0)),   # mask_b (pre-transposed)
        ],
        out_specs=[
            pl.BlockSpec((bt, La, H), lambda i: (i, 0, 0)),   # feature_a
            pl.BlockSpec((bt, Lb, H), lambda i: (i, 0, 0)),   # feature_b
        ],
        compiler_params=pltpu.CompilerParams(
            dimension_semantics=("parallel",),
            vmem_limit_bytes=vmem_limit,
        ),
    )(a, b, mask_a, mask_b_t)

    if Bp != B:
        fa, fb = fa[:B], fb[:B]
    return fa, fb


def _reference(a, b, mask_a, mask_b, temperature):
    """Pure-JAX reference matching the PyTorch forward exactly (f32)."""
    attn = jnp.einsum("bik,bjk->bij", a, b) * temperature
    mask = jnp.einsum("bio,bjo->bij", mask_a, mask_b) != 0.0
    attn = jnp.where(mask, attn, MASK_FILL)
    attn_a = jax.nn.softmax(attn, axis=1)
    attn_b = jax.nn.softmax(attn, axis=2)
    feature_b = jnp.einsum("bij,bik->bjk", attn_a, a)
    feature_a = jnp.einsum("bij,bjk->bik", attn_b, b)
    return feature_a, feature_b


if __name__ == "__main__":
    # Odd batch exercises the cdiv/pad tail-handling path.
    B, La, Lb, H = 3, 8, 16, 32

    key = jax.random.PRNGKey(0)
    ka, kb = jax.random.split(key)
    a = jax.random.normal(ka, (B, La, H), dtype=jnp.float32)
    b = jax.random.normal(kb, (B, Lb, H), dtype=jnp.float32)

    # Deterministic 0/1 padding masks (some trailing positions masked out).
    ma = jnp.ones((B, La, 1), dtype=jnp.float32)
    ma = ma.at[1, La - 2:, 0].set(0.0)
    mb = jnp.ones((B, Lb, 1), dtype=jnp.float32)
    mb = mb.at[1, Lb - 5:, 0].set(0.0)
    mb = mb.at[2, Lb - 3:, 0].set(0.0)

    # Parameter from __init__: temperature = 1 / sqrt(hidden_size)
    temperature = 1.0 / math.sqrt(H)

    # --- f32 path: must match the reference tightly (exact softmax division). ---
    fa, fb = alignment_forward(a, b, ma, mb, temperature)
    fa, fb = jax.block_until_ready((fa, fb))
    ra, rb = _reference(a, b, ma, mb, temperature)
    assert jnp.allclose(fa, ra, atol=1e-3, rtol=1e-3)
    assert jnp.allclose(fb, rb, atol=1e-3, rtol=1e-3)

    # --- bf16 fast path: streams bf16 end-to-end, f32 accumulation on the MXU. ---
    a16 = a.astype(jnp.bfloat16)
    b16 = b.astype(jnp.bfloat16)
    fa16, fb16 = alignment_forward(a16, b16, ma, mb, temperature)
    fa16, fb16 = jax.block_until_ready((fa16, fb16))
    assert fa16.dtype == jnp.bfloat16 and fb16.dtype == jnp.bfloat16
    ra16, rb16 = _reference(a16.astype(jnp.float32), b16.astype(jnp.float32),
                            ma, mb, temperature)
    assert jnp.allclose(fa16.astype(jnp.float32), ra16, atol=8e-2, rtol=8e-2)
    assert jnp.allclose(fb16.astype(jnp.float32), rb16, atol=8e-2, rtol=8e-2)

    print("KERNEL_OK")
</pallas_src>

<mosaic_0001>
module attributes {stable_mosaic.version = 11 : i64} {
  func.func @_alignment_kernel(%arg0: i32, %arg1: memref<2x8x32xf32, #tpu.memory_space<vmem>>, %arg2: memref<2x16x32xf32, #tpu.memory_space<vmem>>, %arg3: memref<2x8x1xf32, #tpu.memory_space<vmem>>, %arg4: memref<2x1x16xf32, #tpu.memory_space<vmem>>, %arg5: memref<2x8x32xf32, #tpu.memory_space<vmem>>, %arg6: memref<2x16x32xf32, #tpu.memory_space<vmem>>) attributes {dimension_semantics = [#tpu.dimension_semantics<parallel>], iteration_bounds = array<i64: 2>, scalar_prefetch = 0 : i64, scratch_operands = 0 : i64, tpu.core_type = #tpu.core_type<tc>, window_params = [{transform_indices = @transform_0, window_bounds = array<i64: 2, 8, 32>}, {transform_indices = @transform_1, window_bounds = array<i64: 2, 16, 32>}, {transform_indices = @transform_2, window_bounds = array<i64: 2, 8, 1>}, {transform_indices = @transform_3, window_bounds = array<i64: 2, 1, 16>}, {transform_indices = @transform_4, window_bounds = array<i64: 2, 8, 32>}, {transform_indices = @transform_5, window_bounds = array<i64: 2, 16, 32>}]} {
    %c0 = arith.constant 0 : index
    %c0_0 = arith.constant 0 : index
    %c0_1 = arith.constant 0 : index
    %0 = vector.load %arg1[%c0, %c0_0, %c0_1] : memref<2x8x32xf32, #tpu.memory_space<vmem>>, vector<2x8x32xf32>
    %c0_2 = arith.constant 0 : index
    %c0_3 = arith.constant 0 : index
    %c0_4 = arith.constant 0 : index
    %1 = vector.load %arg2[%c0_2, %c0_3, %c0_4] : memref<2x16x32xf32, #tpu.memory_space<vmem>>, vector<2x16x32xf32>
    %c0_5 = arith.constant 0 : index
    %c0_6 = arith.constant 0 : index
    %c0_7 = arith.constant 0 : index
    %2 = vector.load %arg3[%c0_5, %c0_6, %c0_7] : memref<2x8x1xf32, #tpu.memory_space<vmem>>, vector<2x8x1xf32>
    %c0_8 = arith.constant 0 : index
    %c0_9 = arith.constant 0 : index
    %c0_10 = arith.constant 0 : index
    %3 = vector.load %arg4[%c0_8, %c0_9, %c0_10] : memref<2x1x16xf32, #tpu.memory_space<vmem>>, vector<2x1x16xf32>
    %cst = arith.constant 0.176776692 : f32
    %4 = vector.broadcast %cst : f32 to vector<2x8x32xf32>
    %5 = arith.mulf %0, %4 : vector<2x8x32xf32>
    "tpu.trace_start"() <{level = 10 : i32, message = "bik,bjk->bij"}> : () -> ()
    %cst_11 = arith.constant dense<0.000000e+00> : vector<2x8x16xf32>
    %6 = tpu.matmul %5, %1, %cst_11 {dimension_numbers = #tpu.dot_dimension_numbers<[2], [2], [1], [1], [0, 0, 0, 1, 1, 1], [0], [0]>} : vector<2x8x32xf32>, vector<2x16x32xf32>, vector<2x8x16xf32> -> vector<2x8x16xf32>
    %cst_12 = arith.constant 0.000000e+00 : f32
    "tpu.trace_stop"() : () -> ()
    %7 = vector.broadcast %cst_12 : f32 to vector<2x8x1xf32>
    %8 = arith.cmpf one, %2, %7 : vector<2x8x1xf32>
    %cst_13 = arith.constant 0.000000e+00 : f32
    %9 = vector.broadcast %cst_13 : f32 to vector<2x1x16xf32>
    %10 = arith.cmpf one, %3, %9 : vector<2x1x16xf32>
    %11 = vector.broadcast %8 : vector<2x8x1xi1> to vector<2x8x16xi1>
    %12 = vector.broadcast %10 : vector<2x1x16xi1> to vector<2x8x16xi1>
    %13 = arith.andi %11, %12 : vector<2x8x16xi1>
    %cst_14 = arith.constant -1.000000e+07 : f32
    %14 = vector.broadcast %cst_14 : f32 to vector<2x8x16xf32>
    %15 = arith.select %13, %6, %14 : vector<2x8x16xi1>, vector<2x8x16xf32>
    %cst_15 = arith.constant dense<0xFF800000> : vector<2x16xf32>
    %16 = vector.multi_reduction <maximumf>, %15, %cst_15 [1] : vector<2x8x16xf32> to vector<2x16xf32>
    %17 = vector.shape_cast %16 : vector<2x16xf32> to vector<2x1x16xf32>
    %18 = vector.broadcast %17 : vector<2x1x16xf32> to vector<2x8x16xf32>
    %19 = arith.subf %15, %18 : vector<2x8x16xf32>
    %20 = math.exp %19 : vector<2x8x16xf32>
    %cst_16 = arith.constant dense<0.000000e+00> : vector<2x16xf32>
    %21 = vector.multi_reduction <add>, %20, %cst_16 [1] : vector<2x8x16xf32> to vector<2x16xf32>
    %22 = vector.shape_cast %21 : vector<2x16xf32> to vector<2x1x16xf32>
    %23 = vector.broadcast %22 : vector<2x1x16xf32> to vector<2x8x16xf32>
    %24 = arith.divf %20, %23 : vector<2x8x16xf32>
    %cst_17 = arith.constant dense<0xFF800000> : vector<2x8xf32>
    %25 = vector.multi_reduction <maximumf>, %15, %cst_17 [2] : vector<2x8x16xf32> to vector<2x8xf32>
    %26 = vector.shape_cast %25 : vector<2x8xf32> to vector<2x8x1xf32>
    %27 = vector.broadcast %26 : vector<2x8x1xf32> to vector<2x8x16xf32>
    %28 = arith.subf %15, %27 : vector<2x8x16xf32>
    %29 = math.exp %28 : vector<2x8x16xf32>
    %cst_18 = arith.constant dense<0.000000e+00> : vector<2x8xf32>
    %30 = vector.multi_reduction <add>, %29, %cst_18 [2] : vector<2x8x16xf32> to vector<2x8xf32>
    %31 = vector.shape_cast %30 : vector<2x8xf32> to vector<2x8x1xf32>
    %32 = vector.broadcast %31 : vector<2x8x1xf32> to vector<2x8x16xf32>
    %33 = arith.divf %29, %32 : vector<2x8x16xf32>
    "tpu.trace_start"() <{level = 10 : i32, message = "bij,bik->bjk"}> : () -> ()
    %cst_19 = arith.constant dense<0.000000e+00> : vector<2x16x32xf32>
    %34 = tpu.matmul %24, %0, %cst_19 {dimension_numbers = #tpu.dot_dimension_numbers<[1], [1], [2], [2], [0, 0, 0, 2, 1, 2], [0], [0]>} : vector<2x8x16xf32>, vector<2x8x32xf32>, vector<2x16x32xf32> -> vector<2x16x32xf32>
    "tpu.trace_stop"() : () -> ()
    "tpu.trace_start"() <{level = 10 : i32, message = "bij,bjk->bik"}> : () -> ()
    %cst_20 = arith.constant dense<0.000000e+00> : vector<2x8x32xf32>
    %35 = tpu.matmul %33, %1, %cst_20 {dimension_numbers = #tpu.dot_dimension_numbers<[2], [1], [1], [2], [0, 0, 0, 1, 1, 2], [0], [0]>} : vector<2x8x16xf32>, vector<2x16x32xf32>, vector<2x8x32xf32> -> vector<2x8x32xf32>
    "tpu.trace_stop"() : () -> ()
    %c0_21 = arith.constant 0 : index
    %c0_22 = arith.constant 0 : index
    %c0_23 = arith.constant 0 : index
    %36 = vector.load %arg5[%c0_21, %c0_22, %c0_23] : memref<2x8x32xf32, #tpu.memory_space<vmem>>, vector<2x8x32xf32>
    tpu.vector_store %arg5[%c0_21, %c0_22, %c0_23], %35 {strides = array<i32>} : memref<2x8x32xf32, #tpu.memory_space<vmem>>, vector<2x8x32xf32>,
    %c0_24 = arith.constant 0 : index
    %c0_25 = arith.constant 0 : index
    %c0_26 = arith.constant 0 : index
    %37 = vector.load %arg6[%c0_24, %c0_25, %c0_26] : memref<2x16x32xf32, #tpu.memory_space<vmem>>, vector<2x16x32xf32>
    tpu.vector_store %arg6[%c0_24, %c0_25, %c0_26], %34 {strides = array<i32>} : memref<2x16x32xf32, #tpu.memory_space<vmem>>, vector<2x16x32xf32>,
    return
  }
  func.func @transform_0(%arg0: i32) -> (i32, i32, i32) {
    %c0_i32 = arith.constant 0 : i32
    %c0_i32_0 = arith.constant 0 : i32
    %c0_i32_1 = arith.constant 0 : i32
    return %arg0, %c0_i32, %c0_i32_0 : i32, i32, i32
  }
  func.func @transform_1(%arg0: i32) -> (i32, i32, i32) {
    %c0_i32 = arith.constant 0 : i32
    %c0_i32_0 = arith.constant 0 : i32
    %c0_i32_1 = arith.constant 0 : i32
    return %arg0, %c0_i32, %c0_i32_0 : i32, i32, i32
  }
  func.func @transform_2(%arg0: i32) -> (i32, i32, i32) {
    %c0_i32 = arith.constant 0 : i32
    %c0_i32_0 = arith.constant 0 : i32
    %c0_i32_1 = arith.constant 0 : i32
    return %arg0, %c0_i32, %c0_i32_0 : i32, i32, i32
  }
  func.func @transform_3(%arg0: i32) -> (i32, i32, i32) {
    %c0_i32 = arith.constant 0 : i32
    %c0_i32_0 = arith.constant 0 : i32
    %c0_i32_1 = arith.constant 0 : i32
    return %arg0, %c0_i32, %c0_i32_0 : i32, i32, i32
  }
  func.func @transform_4(%arg0: i32) -> (i32, i32, i32) {
    %c0_i32 = arith.constant 0 : i32
    %c0_i32_0 = arith.constant 0 : i32
    %c0_i32_1 = arith.constant 0 : i32
    return %arg0, %c0_i32, %c0_i32_0 : i32, i32, i32
  }
  func.func @transform_5(%arg0: i32) -> (i32, i32, i32) {
    %c0_i32 = arith.constant 0 : i32
    %c0_i32_0 = arith.constant 0 : i32
    %c0_i32_1 = arith.constant 0 : i32
    return %arg0, %c0_i32, %c0_i32_0 : i32, i32, i32
  }
}

</mosaic_0001>

<llo_original>
// kernel: tpu_custom_call.1
$region0: #{tpu_custom_call.1}
  #allocation0 [shape = 'u32[]', space=smem, size = 0x4, offset = 0x4, fixed_abs, tag = 'smem constant byte address 0x4 - core index']
  #allocation1 [shape = 'u32[144,128]{1,0:T(1,128)}', space=vmem, size = 0x12000, scoped, tag = 'internal scratch']
  %s0 = inlined_call_operand.vmem [shape: f32[4,8,32], index: 0, kind: input, shape index: {}]
  %s1 = inlined_call_operand.hbm [shape: f32[4,16,32], index: 1, kind: input, shape index: {}]
  %s2 = inlined_call_operand.vmem [shape: f32[4,8,1], index: 2, kind: input, shape index: {}]
  %s3 = inlined_call_operand.vmem [shape: f32[4,1,16], index: 3, kind: input, shape index: {}]
  %s4 = inlined_call_operand.hbm [shape: f32[4,8,32], index: 4, kind: output, shape index: {0}]
  %s5 = inlined_call_operand.hbm [shape: f32[4,16,32], index: 5, kind: output, shape index: {1}]
  %6 = xla_tuple %s4, %s5
  %s7 = sld [smem:[#allocation0]]
  $region61: #{tpu_custom_call.1} parent=0
    _
  %s9 = ssub.s32 1, %s7
  %s10 = scalar_select 0, %s9, %s7
  $region1: #{tpu_custom_call.1} parent=0
    #allocation2 [shape = 'u8[32768]{0}', space=vmem, size = 0x8000, scoped, tag = 'input window, operand 1']
    #allocation3 [shape = 's32[2]{0}', space=sflag, size = 0x8, scoped, tag = 'scoped memory for tpu_custom_call.1']
    #allocation4 [shape = 's32[2]{0}', space=sflag, size = 0x8, scoped, tag = 'scoped memory for tpu_custom_call.1']
    #allocation5 [shape = 'u8[16384]{0}', space=vmem, size = 0x4000, scoped, tag = 'output window, operand 0']
    #allocation6 [shape = 'u8[32768]{0}', space=vmem, size = 0x8000, scoped, tag = 'output window, operand 1']
    #allocation7 [shape = 's32[2]{0}', space=sflag, size = 0x8, scoped, tag = 'scoped memory for tpu_custom_call.1']
    %11 = vsyncpa [#allocation3], 0
    %s12 = scalar_lea.sflag [#allocation3], 1
    %13 = vsyncpa %s12, 0
    %14 = vsyncpa [#allocation4], 0
    %s15 = scalar_lea.sflag [#allocation4], 1
    %16 = vsyncpa %s15, 0
    %17 = vsyncpa [#allocation7], 0
    %s18 = scalar_lea.sflag [#allocation7], 1
    %19 = vsyncpa %s18, 0
    loop: start=0, step=1, limit=4
    $region2: #{tpu_custom_call.1} parent=1 // loop_pre_header
      _
    $region3: #{tpu_custom_call.1} parent=1 // loop_header
      %s21 = sphi 0, %s25
      %p22 = scmp.ge.s32.totalorder %s21, 4
      %s31 = sphi 0, %s33
      %s34 = sphi 0, %s31
      %s35 = sphi 0, %s34
      %s51 = sphi 0, %s35
      %s57 = sphi 0, %s59
      %s60 = sphi 0, %s57
      %s61 = sphi 0, %s60
      %s77 = sphi 0, %s61
      %s83 = sphi 0, %s85
      %s86 = sphi 0, %s83
      %s87 = sphi 0, %s86
      %s103 = sphi 0, %s87
      %s109 = sphi 0, %s111
      %s112 = sphi 0, %s109
      %s113 = sphi 0, %s112
      %s129 = sphi 0, %s113
      %s135 = sphi 0, %s137
      %s138 = sphi 0, %s135
      %s139 = sphi 0, %s138
      %s155 = sphi 0, %s139
      %s161 = sphi 0, %s163
      %s164 = sphi 0, %s161
      %s165 = sphi 0, %s164
      %s181 = sphi 0, %s165
    $region4: #{tpu_custom_call.1} parent=1 // loop_header_branch
      %24 = sbr.rel (%p22) target = $region8
    $region5: #{tpu_custom_call.1} parent=1 // loop_body
      %s26 = ssub.s32 %s21, 1
      %s27 = ssub.s32 %s21, 2
      %s28 = sadd.s32 %s21, 1
      %s29 = ssub.s32 %s21, %s28
      %p30 = scmp.eq.s32.totalorder %s29, 0
      %s32 = sadd.s32 %s31, 1
      %s33 = scalar_select %p30, %s31, %s32
      %p36 = pneg %p30
      %p37 = scmp.eq.s32.totalorder %s21, 1
      %p38 = por %p36, %p37
      %p39 = scmp.ne.s32.totalorder %s31, %s34
      %p40 = scmp.eq.s32.totalorder %s21, 0
      %p41 = por %p39, %p40
      %p42 = scmp.ne.s32.totalorder %s31, %s34
      %p43 = scmp.eq.s32.totalorder %s26, 1
      %p44 = por %p42, %p43
      %p45 = scmp.ne.s32.totalorder %s34, %s35
      %p46 = scmp.eq.s32.totalorder %s26, 0
      %p47 = por %p45, %p46
      %p48 = scmp.ne.s32.totalorder %s34, %s35
      %p49 = scmp.eq.s32.totalorder %s27, 1
      %p50 = por %p48, %p49
      %p52 = scmp.ne.s32.totalorder %s35, %s51
      %p53 = scmp.eq.s32.totalorder %s27, 0
      %p54 = por %p52, %p53
      %s55 = ssub.s32 %s21, %s28
      %p56 = scmp.eq.s32.totalorder %s55, 0
      %s58 = sadd.s32 %s57, 1
      %s59 = scalar_select %p56, %s57, %s58
      %p62 = pneg %p56
      %p63 = scmp.eq.s32.totalorder %s21, 1
      %p64 = por %p62, %p63
      %p65 = scmp.ne.s32.totalorder %s57, %s60
      %p66 = scmp.eq.s32.totalorder %s21, 0
      %p67 = por %p65, %p66
      %p68 = scmp.ne.s32.totalorder %s57, %s60
      %p69 = scmp.eq.s32.totalorder %s26, 1
      %p70 = por %p68, %p69
      %p71 = scmp.ne.s32.totalorder %s60, %s61
      %p72 = scmp.eq.s32.totalorder %s26, 0
      %p73 = por %p71, %p72
      %p74 = scmp.ne.s32.totalorder %s60, %s61
      %p75 = scmp.eq.s32.totalorder %s27, 1
      %p76 = por %p74, %p75
      %p78 = scmp.ne.s32.totalorder %s61, %s77
      %p79 = scmp.eq.s32.totalorder %s27, 0
      %p80 = por %p78, %p79
      %s81 = ssub.s32 %s21, %s28
      %p82 = scmp.eq.s32.totalorder %s81, 0
      %s84 = sadd.s32 %s83, 1
      %s85 = scalar_select %p82, %s83, %s84
      %p88 = pneg %p82
      %p89 = scmp.eq.s32.totalorder %s21, 1
      %p90 = por %p88, %p89
      %p91 = scmp.ne.s32.totalorder %s83, %s86
      %p92 = scmp.eq.s32.totalorder %s21, 0
      %p93 = por %p91, %p92
      %p94 = scmp.ne.s32.totalorder %s83, %s86
      %p95 = scmp.eq.s32.totalorder %s26, 1
      %p96 = por %p94, %p95
      %p97 = scmp.ne.s32.totalorder %s86, %s87
      %p98 = scmp.eq.s32.totalorder %s26, 0
      %p99 = por %p97, %p98
      %p100 = scmp.ne.s32.totalorder %s86, %s87
      %p101 = scmp.eq.s32.totalorder %s27, 1
      %p102 = por %p100, %p101
      %p104 = scmp.ne.s32.totalorder %s87, %s103
      %p105 = scmp.eq.s32.totalorder %s27, 0
      %p106 = por %p104, %p105
      %s107 = ssub.s32 %s21, %s28
      %p108 = scmp.eq.s32.totalorder %s107, 0
      %s110 = sadd.s32 %s109, 1
      %s111 = scalar_select %p108, %s109, %s110
      %p114 = pneg %p108
      %p115 = scmp.eq.s32.totalorder %s21, 1
      %p116 = por %p114, %p115
      %p117 = scmp.ne.s32.totalorder %s109, %s112
      %p118 = scmp.eq.s32.totalorder %s21, 0
      %p119 = por %p117, %p118
      %p120 = scmp.ne.s32.totalorder %s109, %s112
      %p121 = scmp.eq.s32.totalorder %s26, 1
      %p122 = por %p120, %p121
      %p123 = scmp.ne.s32.totalorder %s112, %s113
      %p124 = scmp.eq.s32.totalorder %s26, 0
      %p125 = por %p123, %p124
      %p126 = scmp.ne.s32.totalorder %s112, %s113
      %p127 = scmp.eq.s32.totalorder %s27, 1
      %p128 = por %p126, %p127
      %p130 = scmp.ne.s32.totalorder %s113, %s129
      %p131 = scmp.eq.s32.totalorder %s27, 0
      %p132 = por %p130, %p131
      %s133 = ssub.s32 %s21, %s28
      %p134 = scmp.eq.s32.totalorder %s133, 0
      %s136 = sadd.s32 %s135, 1
      %s137 = scalar_select %p134, %s135, %s136
      %p140 = pneg %p134
      %p141 = scmp.eq.s32.totalorder %s21, 1
      %p142 = por %p140, %p141
      %p143 = scmp.ne.s32.totalorder %s135, %s138
      %p144 = scmp.eq.s32.totalorder %s21, 0
      %p145 = por %p143, %p144
      %p146 = scmp.ne.s32.totalorder %s135, %s138
      %p147 = scmp.eq.s32.totalorder %s26, 1
      %p148 = por %p146, %p147
      %p149 = scmp.ne.s32.totalorder %s138, %s139
      %p150 = scmp.eq.s32.totalorder %s26, 0
      %p151 = por %p149, %p150
      %p152 = scmp.ne.s32.totalorder %s138, %s139
      %p153 = scmp.eq.s32.totalorder %s27, 1
      %p154 = por %p152, %p153
      %p156 = scmp.ne.s32.totalorder %s139, %s155
      %p157 = scmp.eq.s32.totalorder %s27, 0
      %p158 = por %p156, %p157
      %s159 = ssub.s32 %s21, %s28
      %p160 = scmp.eq.s32.totalorder %s159, 0
      %s162 = sadd.s32 %s161, 1
      %s163 = scalar_select %p160, %s161, %s162
      %p166 = pneg %p160
      %p167 = scmp.eq.s32.totalorder %s21, 1
      %p168 = por %p166, %p167
      %p169 = scmp.ne.s32.totalorder %s161, %s164
      %p170 = scmp.eq.s32.totalorder %s21, 0
      %p171 = por %p169, %p170
      %p172 = scmp.ne.s32.totalorder %s161, %s164
      %p173 = scmp.eq.s32.totalorder %s26, 1
      %p174 = por %p172, %p173
      %p175 = scmp.ne.s32.totalorder %s164, %s165
      %p176 = scmp.eq.s32.totalorder %s26, 0
      %p177 = por %p175, %p176
      %p178 = scmp.ne.s32.totalorder %s164, %s165
      %p179 = scmp.eq.s32.totalorder %s27, 1
      %p180 = por %p178, %p179
      %p182 = scmp.ne.s32.totalorder %s165, %s181
      %p183 = scmp.eq.s32.totalorder %s27, 0
      %p184 = por %p182, %p183
      %p185 = scmp.le.s32.totalorder 1, %s21
      %p186 = scmp.lt.s32.totalorder %s21, 3
      %p187 = pnand %p185, %p186
      %p188 = pneg %p187
      // Predicated region
      $region9: #{tpu_custom_call.1} parent=5 // pred_check
        _
      $region10: #{tpu_custom_call.1} parent=5 // pred_check_branch
        %190 = sbr.rel (%p187) target = $region12
      $region11: #{tpu_custom_call.1} parent=5 // pred_region
        %s191 = ssub.s32 %s21, 1
      $region12: #{tpu_custom_call.1} parent=5 // pred_fallthru
        _
      %p192 = scmp.lt.s32.totalorder %s21, 2
      // Predicated region
      $region13: #{tpu_custom_call.1} parent=5 // pred_check
        %p193 = pneg %p192
      $region14: #{tpu_custom_call.1} parent=5 // pred_check_branch
        %195 = sbr.rel (%p193) target = $region16
      $region15: #{tpu_custom_call.1} parent=5 // pred_region
        // Predicated region
        $region17: #{tpu_custom_call.1} parent=15 // pred_check
          %p196 = pneg %p41
        $region18: #{tpu_custom_call.1} parent=15 // pred_check_branch
          %198 = sbr.rel (%p196) target = $region20
        $region19: #{tpu_custom_call.1} parent=15 // pred_region
          %s199 = smul.u32 2, %s21
          %p200 = scmp.lt.s32.totalorder %s199, 3
          %s201 = scalar_select %p200, %s199, 3
          %s202 = smul.addr %s201, 8
          %s203 = scalar_lea.vmem %s0, %s202
          %s204 = smul.u32 2, %s21
        $region20: #{tpu_custom_call.1} parent=15 // pred_fallthru
          _
        // Predicated region
        $region21: #{tpu_custom_call.1} parent=15 // pred_check
          %p205 = pneg %p67
        $region22: #{tpu_custom_call.1} parent=15 // pred_check_branch
          %207 = sbr.rel (%p205) target = $region24
        $region23: #{tpu_custom_call.1} parent=15 // pred_region
          %s208 = sand.u32 %s57, 1
          %s209 = scalar_lea.sflag [#allocation3], %s208
          %s210 = sand.u32 %s57, 1
          %s211 = smul.addr %s210, 32
          %s212 = scalar_lea.vmem [#allocation2], %s211
          %s213 = smul.u32 2, %s21
          %s215 = ssub.s32 512, 512
          %216 = vsyncadd %s209, %s215
          %s217 = smul.addr %s213, 2
          %s218 = smul.addr %s217, 128
          %s219 = scalar_lea.hbm %s1, %s218
          %s220 = sshll.u32 %s212, 4
          %s221 = int_to_ptr.vmem [resolvable:$true] %s220
          %226 = dma.hbm_to_vmem [thread:$0]  %s219, 512, %s221, %s209, 128, 128, 8
        $region24: #{tpu_custom_call.1} parent=15 // pred_fallthru
          _
        // Predicated region
        $region25: #{tpu_custom_call.1} parent=15 // pred_check
          %p227 = pneg %p93
        $region26: #{tpu_custom_call.1} parent=15 // pred_check_branch
          %229 = sbr.rel (%p227) target = $region28
        $region27: #{tpu_custom_call.1} parent=15 // pred_region
          %s230 = smul.u32 2, %s21
          %p231 = scmp.lt.s32.totalorder %s230, 3
          %s232 = scalar_select %p231, %s230, 3
          %s233 = smul.addr %s232, 8
          %s234 = scalar_lea.vmem %s2, %s233
          %s235 = smul.u32 2, %s21
        $region28: #{tpu_custom_call.1} parent=15 // pred_fallthru
          _
        // Predicated region
        $region29: #{tpu_custom_call.1} parent=15 // pred_check
          %p236 = pneg %p119
        $region30: #{tpu_custom_call.1} parent=15 // pred_check_branch
          %238 = sbr.rel (%p236) target = $region32
        $region31: #{tpu_custom_call.1} parent=15 // pred_region
          %s239 = smul.u32 2, %s21
          %p240 = scmp.lt.s32.totalorder %s239, 3
          %s241 = scalar_select %p240, %s239, 3
          %s242 = scalar_lea.vmem %s3, %s241
          %s243 = smul.u32 2, %s21
        $region32: #{tpu_custom_call.1} parent=15 // pred_fallthru
          _
      $region16: #{tpu_custom_call.1} parent=5 // pred_fallthru
        _
      %p244 = scmp.le.s32.totalorder 1, %s21
      %p245 = scmp.lt.s32.totalorder %s21, 3
      %p246 = pnand %p244, %p245
      %p247 = pneg %p246
      // Predicated region
      $region33: #{tpu_custom_call.1} parent=5 // pred_check
        _
      $region34: #{tpu_custom_call.1} parent=5 // pred_check_branch
        %249 = sbr.rel (%p246) target = $region36
      $region35: #{tpu_custom_call.1} parent=5 // pred_region
        %s250 = ssub.s32 %s21, 1
        %s251 = sand.u32 %s60, 1
        %s252 = scalar_lea.sflag [#allocation3], %s251
        %s253 = sand.u32 %s60, 1
        %s254 = smul.addr %s253, 32
        %s255 = scalar_lea.vmem [#allocation2], %s254
        // Predicated region
        $region37: #{tpu_custom_call.1} parent=35 // pred_check
          %p256 = pneg %p73
        $region38: #{tpu_custom_call.1} parent=35 // pred_check_branch
          %258 = sbr.rel (%p256) target = $region40
        $region39: #{tpu_custom_call.1} parent=35 // pred_region
          %259 = dma.done %s252, 512
        $region40: #{tpu_custom_call.1} parent=35 // pred_fallthru
          _
        %s260 = smul.u32 2, %s26
        %p261 = scmp.lt.s32.totalorder %s260, 3
        %s262 = scalar_select %p261, %s260, 3
        %s263 = smul.addr %s262, 8
        %s264 = scalar_lea.vmem %s0, %s263
        %p265 = pneg %p47
        %p266 = pneg %p44
        %s267 = sand.u32 %s60, 1
        %s268 = scalar_lea.sflag [#allocation3], %s267
        %s269 = sand.u32 %s60, 1
        %s270 = smul.addr %s269, 32
        %s271 = scalar_lea.vmem [#allocation2], %s270
        %p272 = pneg %p73
        %p273 = pneg %p70
        %s274 = smul.u32 2, %s26
        %p275 = scmp.lt.s32.totalorder %s274, 3
        %s276 = scalar_select %p275, %s274, 3
        %s277 = smul.addr %s276, 8
        %s278 = scalar_lea.vmem %s2, %s277
        %p279 = pneg %p99
        %p280 = pneg %p96
        %s281 = smul.u32 2, %s26
        %p282 = scmp.lt.s32.totalorder %s281, 3
        %s283 = scalar_select %p282, %s281, 3
        %s284 = scalar_lea.vmem %s3, %s283
        %p285 = pneg %p125
        %p286 = pneg %p122
        %p287 = pneg %p151
        %p288 = pneg %p148
        %s289 = sand.u32 %s138, 1
        %s290 = scalar_lea.sflag [#allocation4], %s289
        %s291 = sand.u32 %s138, 1
        %s292 = smul.addr %s291, 16
        %s293 = scalar_lea.vmem [#allocation5], %s292
        %p294 = pneg %p177
        %p295 = pneg %p174
        %s296 = sand.u32 %s164, 1
        %s297 = scalar_lea.sflag [#allocation7], %s296
        %s298 = sand.u32 %s164, 1
        %s299 = smul.addr %s298, 32
        %s300 = scalar_lea.vmem [#allocation6], %s299
        %s301 = smul.u32 2, %s26
        %p302 = scmp.lt.s32.totalorder %s301, 3
        %s303 = scalar_select %p302, %s301, 3
        %s304 = smul.addr %s303, 8
        %s305 = scalar_lea.vmem %s0, %s304
        %s306 = smul.u32 2, %s26
        %s307 = smul.u32 2, %s26
        %s308 = smul.u32 2, %s26
        %p309 = scmp.lt.s32.totalorder %s308, 3
        %s310 = scalar_select %p309, %s308, 3
        %s311 = smul.addr %s310, 8
        %s312 = scalar_lea.vmem %s2, %s311
        %s313 = smul.u32 2, %s26
        %s314 = smul.u32 2, %s26
        %p315 = scmp.lt.s32.totalorder %s314, 3
        %s316 = scalar_select %p315, %s314, 3
        %s317 = scalar_lea.vmem %s3, %s316
        %s318 = smul.u32 2, %s26
        %s319 = smul.u32 2, %s26
        %s320 = smul.u32 2, %s26
        %v321 = vld [vmem:[%s305] sm:$0xff]
        %v322 = vld [vmem:[%s305 + $0x8] sm:$0xff]
        %v323 = vld [vmem:[%s255] sm:$0xff]
        %v324 = vld [vmem:[%s255 + $0x8] sm:$0xff]
        %v325 = vld [vmem:[%s255 + $0x10] sm:$0xff]
        %v326 = vld [vmem:[%s255 + $0x18] sm:$0xff]
        %v327 = vld [vmem:[%s312] sm:$0xff]
        %v328 = vld [vmem:[%s312 + $0x8] sm:$0xff]
        %v329 = vld [vmem:[%s317] sm:$0x1]
        %v330 = vld [vmem:[%s317 + $0x1] sm:$0x1]
        %v331 = vmul.f32 %v321, 0.17677669
        %v332 = vmul.f32 %v322, 0.17677669
        %vm333 = vcmask 261120
        %v335 = vsel %vm333, %v331, 0
        %v338 = vsel %vm333, %v323, 0
        %v341 = vsel %vm333, %v324, 0
        %343 = vmatprep.subr.mxu0 0.0
        %344 = vmatpush1.xpose.msra.mxu0 %v338
        %345 = vmatprep.subr.mxu0 0.0
        %346 = vmatpush1.xpose.msra.mxu0 %v341
        %347 = vmatprep.subr.mxu0 0.0
        %348 = vmatpush1.xpose.msra.mxu0 0.0
        %349 = vmatprep.subr.mxu0 0.0
        %350 = vmatpush1.xpose.msra.mxu0 0.0
        %351 = vmatprep.subr.mxu0 0.0
        %352 = vmatpush1.xpose.msra.mxu0 0.0
        %353 = vmatprep.subr.mxu0 0.0
        %354 = vmatpush1.xpose.msra.mxu0 0.0
        %355 = vmatprep.subr.mxu0 0.0
        %356 = vmatpush1.xpose.msra.mxu0 0.0
        %357 = vmatprep.subr.mxu0 0.0
        %358 = vmatpush1.xpose.msra.mxu0 0.0
        %359 = vmatprep.subr.mxu0 0.0
        %360 = vmatpush1.xpose.msra.mxu0 0.0
        %361 = vmatprep.subr.mxu0 0.0
        %362 = vmatpush1.xpose.msra.mxu0 0.0
        %363 = vmatprep.subr.mxu0 0.0
        %364 = vmatpush1.xpose.msra.mxu0 0.0
        %365 = vmatprep.subr.mxu0 0.0
        %366 = vmatpush1.xpose.msra.mxu0 0.0
        %367 = vmatprep.subr.mxu0 0.0
        %368 = vmatpush1.xpose.msra.mxu0 0.0
        %369 = vmatprep.subr.mxu0 0.0
        %370 = vmatpush1.xpose.msra.mxu0 0.0
        %371 = vmatprep.subr.mxu0 0.0
        %372 = vmatpush1.xpose.msra.mxu0 0.0
        %373 = vmatprep.subr.mxu0 0.0
        %374 = vmatpush1.xpose.msra.mxu0 0.0
        %375 = vmatprep.subr.mxu0 0.0
        %376 = vmatpush1.xpose.msra.mxu0 0.0
        %377 = vmatprep.subr.mxu0 0.0
        %378 = vmatpush1.xpose.msra.mxu0 0.0
        %379 = vmatprep.subr.mxu0 0.0
        %380 = vmatpush1.xpose.msra.mxu0 0.0
        %381 = vmatprep.subr.mxu0 0.0
        %382 = vmatpush1.xpose.msra.mxu0 0.0
        %383 = vmatprep.subr.mxu0 0.0
        %384 = vmatpush1.xpose.msra.mxu0 0.0
        %385 = vmatprep.subr.mxu0 0.0
        %386 = vmatpush1.xpose.msra.mxu0 0.0
        %387 = vmatprep.subr.mxu0 0.0
        %388 = vmatpush1.xpose.msra.mxu0 0.0
        %389 = vmatprep.subr.mxu0 0.0
        %390 = vmatpush1.xpose.msra.mxu0 0.0
        %391 = vmatprep.subr.mxu0 0.0
        %392 = vmatpush1.xpose.msra.mxu0 0.0
        %393 = vmatprep.subr.mxu0 0.0
        %394 = vmatpush1.xpose.msra.mxu0 0.0
        %395 = vmatprep.subr.mxu0 0.0
        %396 = vmatpush1.xpose.msra.mxu0 0.0
        %397 = vmatprep.subr.mxu0 0.0
        %398 = vmatpush1.xpose.msra.mxu0 0.0
        %399 = vmatprep.subr.mxu0 0.0
        %400 = vmatpush1.xpose.msra.mxu0 0.0
        %401 = vmatprep.subr.mxu0 0.0
        %402 = vmatpush1.xpose.msra.mxu0 0.0
        %403 = vmatprep.subr.mxu0 0.0
        %404 = vmatpush1.xpose.msra.mxu0 0.0
        %405 = vmatprep.subr.mxu0 0.0
        %406 = vmatpush1.xpose.msra.mxu0 0.0
        %407 = vmatprep.mubr.f32.mxu0 0.0
        %408 = vmatmul.mubr.f32.gmra.mrb[0].mxu0 %v335
        %v409 = vpop.f32.mrb[0].mxu0
        %v410 = vadd.f32 0.0, %v409
        %v411 = vpop.f32.mrb[0].mxu0
        %412 = vdwg.mxu0
        %v414 = vsel %vm333, %v332, 0
        %v417 = vsel %vm333, %v325, 0
        %v420 = vsel %vm333, %v326, 0
        %422 = vmatprep.subr.mxu0 0.0
        %423 = vmatpush1.xpose.msra.mxu0 %v417
        %424 = vmatprep.subr.mxu0 0.0
        %425 = vmatpush1.xpose.msra.mxu0 %v420
        %426 = vmatprep.subr.mxu0 0.0
        %427 = vmatpush1.xpose.msra.mxu0 0.0
        %428 = vmatprep.subr.mxu0 0.0
        %429 = vmatpush1.xpose.msra.mxu0 0.0
        %430 = vmatprep.subr.mxu0 0.0
        %431 = vmatpush1.xpose.msra.mxu0 0.0
        %432 = vmatprep.subr.mxu0 0.0
        %433 = vmatpush1.xpose.msra.mxu0 0.0
        %434 = vmatprep.subr.mxu0 0.0
        %435 = vmatpush1.xpose.msra.mxu0 0.0
        %436 = vmatprep.subr.mxu0 0.0
        %437 = vmatpush1.xpose.msra.mxu0 0.0
        %438 = vmatprep.subr.mxu0 0.0
        %439 = vmatpush1.xpose.msra.mxu0 0.0
        %440 = vmatprep.subr.mxu0 0.0
        %441 = vmatpush1.xpose.msra.mxu0 0.0
        %442 = vmatprep.subr.mxu0 0.0
        %443 = vmatpush1.xpose.msra.mxu0 0.0
        %444 = vmatprep.subr.mxu0 0.0
        %445 = vmatpush1.xpose.msra.mxu0 0.0
        %446 = vmatprep.subr.mxu0 0.0
        %447 = vmatpush1.xpose.msra.mxu0 0.0
        %448 = vmatprep.subr.mxu0 0.0
        %449 = vmatpush1.xpose.msra.mxu0 0.0
        %450 = vmatprep.subr.mxu0 0.0
        %451 = vmatpush1.xpose.msra.mxu0 0.0
        %452 = vmatprep.subr.mxu0 0.0
        %453 = vmatpush1.xpose.msra.mxu0 0.0
        %454 = vmatprep.subr.mxu0 0.0
        %455 = vmatpush1.xpose.msra.mxu0 0.0
        %456 = vmatprep.subr.mxu0 0.0
        %457 = vmatpush1.xpose.msra.mxu0 0.0
        %458 = vmatprep.subr.mxu0 0.0
        %459 = vmatpush1.xpose.msra.mxu0 0.0
        %460 = vmatprep.subr.mxu0 0.0
        %461 = vmatpush1.xpose.msra.mxu0 0.0
        %462 = vmatprep.subr.mxu0 0.0
        %463 = vmatpush1.xpose.msra.mxu0 0.0
        %464 = vmatprep.subr.mxu0 0.0
        %465 = vmatpush1.xpose.msra.mxu0 0.0
        %466 = vmatprep.subr.mxu0 0.0
        %467 = vmatpush1.xpose.msra.mxu0 0.0
        %468 = vmatprep.subr.mxu0 0.0
        %469 = vmatpush1.xpose.msra.mxu0 0.0
        %470 = vmatprep.subr.mxu0 0.0
        %471 = vmatpush1.xpose.msra.mxu0 0.0
        %472 = vmatprep.subr.mxu0 0.0
        %473 = vmatpush1.xpose.msra.mxu0 0.0
        %474 = vmatprep.subr.mxu0 0.0
        %475 = vmatpush1.xpose.msra.mxu0 0.0
        %476 = vmatprep.subr.mxu0 0.0
        %477 = vmatpush1.xpose.msra.mxu0 0.0
        %478 = vmatprep.subr.mxu0 0.0
        %479 = vmatpush1.xpose.msra.mxu0 0.0
        %480 = vmatprep.subr.mxu0 0.0
        %481 = vmatpush1.xpose.msra.mxu0 0.0
        %482 = vmatprep.subr.mxu0 0.0
        %483 = vmatpush1.xpose.msra.mxu0 0.0
        %484 = vmatprep.subr.mxu0 0.0
        %485 = vmatpush1.xpose.msra.mxu0 0.0
        %486 = vmatprep.mubr.f32.mxu0 0.0
        %487 = vmatmul.mubr.f32.gmra.mrb[0].mxu0 %v414
        %v488 = vpop.f32.mrb[0].mxu0
        %v489 = vadd.f32 0.0, %v488
        %v490 = vpop.f32.mrb[0].mxu0
        %491 = vdwg.mxu0
        %vm492 = vcmp.ne.f32.partialorder %v327, 0.0
        %vm493 = vcmp.ne.f32.partialorder %v328, 0.0
        %vm494 = vcmp.ne.f32.partialorder %v329, 0.0
        %vm495 = vcmp.ne.f32.partialorder %v330, 0.0
        %v496 = vsel %vm492, 1, 0
        %v497 = vsel %vm493, 1, 0
        %498 = vset.pattern.permute.xlu0 0
        %499 = vperm.xlu0 %498, %v496
        %v500 = vpop.permute.xlu0 %499
        %501 = vset.pattern.permute.xlu0 0
        %502 = vperm.xlu0 %501, %v497
        %v503 = vpop.permute.xlu0 %502
        %vm504 = vcmp.eq.s32.totalorder %v500, 1
        %vm505 = vcmp.eq.s32.totalorder %v503, 1
        %v506 = vsel %vm494, 1, 0
        %v507 = vsel %vm495, 1, 0
        %v508 = vlaneseq
        %v509 = vshrl.u32 %v508, 7
        %v510 = vsub.s32 0, %v509
        %v511 = vrot.slane %v506, %v510
        %v512 = vlaneseq
        %v513 = vshrl.u32 %v512, 7
        %v514 = vsub.s32 0, %v513
        %v515 = vrot.slane %v507, %v514
        %vm516 = vcmp.eq.s32.totalorder %v511, 1
        %vm517 = vcmp.eq.s32.totalorder %v515, 1
        %vm518 = vmand %vm504, %vm516
        %vm519 = vmand %vm505, %vm517
        %v520 = vsel %vm518, %v410, -10000000.0
        %v521 = vsel %vm519, %v489, -10000000.0
        %vm522 = vcmask 130048
        %v523 = vsel %vm522, %v520, -inf
        %v524 = vrot.slane %v523, 4
        %v525 = vmax.f32 %v523, %v524
        %v526 = vrot.slane %v525, 2
        %v527 = vmax.f32 %v525, %v526
        %v528 = vrot.slane %v527, 1
        %v529 = vmax.f32 %v527, %v528
        %v530 = vsel %vm522, %v521, -inf
        %v531 = vrot.slane %v530, 4
        %v532 = vmax.f32 %v530, %v531
        %v533 = vrot.slane %v532, 2
        %v534 = vmax.f32 %v532, %v533
        %v535 = vrot.slane %v534, 1
        %v536 = vmax.f32 %v534, %v535
        %v537 = vsub.f32 %v520, %v529
        %v538 = vsub.f32 %v521, %v536
        %v539 = vmul.f32 %v537, 1.442695
        %v540 = vpow.pop %v539
        %v541 = vmul.f32 %v538, 1.442695
        %v542 = vpow.pop %v541
        %v543 = vsel %vm522, %v540, 0.0
        %v544 = vrot.slane %v543, 4
        %v545 = vadd.f32 %v543, %v544
        %v546 = vrot.slane %v545, 2
        %v547 = vadd.f32 %v545, %v546
        %v548 = vrot.slane %v547, 1
        %v549 = vadd.f32 %v547, %v548
        %v550 = vsel %vm522, %v542, 0.0
        %v551 = vrot.slane %v550, 4
        %v552 = vadd.f32 %v550, %v551
        %v553 = vrot.slane %v552, 2
        %v554 = vadd.f32 %v552, %v553
        %v555 = vrot.slane %v554, 1
        %v556 = vadd.f32 %v554, %v555
        %v557 = vrcp.pop %v549
        %v558 = vmul.f32 %v540, %v557
        %v559 = vrcp.pop %v556
        %v560 = vmul.f32 %v542, %v559
        %561 = vmax.xlane.f32.xlu0 %v523
        %v562 = vpop.xlane.xlu0 %561
        %563 = vmax.xlane.f32.xlu0 %v530
        %v564 = vpop.xlane.xlu0 %563
        %v565 = vsub.f32 %v520, %v562
        %v566 = vsub.f32 %v521, %v564
        %v567 = vmul.f32 %v565, 1.442695
        %v568 = vpow.pop %v567
        %v569 = vmul.f32 %v566, 1.442695
        %v570 = vpow.pop %v569
        %v571 = vsel %vm522, %v568, 0.0
        %572 = vadd.xlane.f32.xlu0 %v571
        %v573 = vpop.xlane.xlu0 %572
        %v574 = vsel %vm522, %v570, 0.0
        %575 = vadd.xlane.f32.xlu0 %v574
        %v576 = vpop.xlane.xlu0 %575
        %v577 = vrcp.pop %v573
        %v578 = vmul.f32 %v568, %v577
        %v579 = vrcp.pop %v576
        %v580 = vmul.f32 %v570, %v579
        %581 = vxpose.xlu0.b32.start [1/16] %v558, 128
        %582 = vxpose.xlu0.b32.cont [2/16] 0.0, 128
        %583 = vxpose.xlu0.b32.cont [3/16] 0.0, 128
        %584 = vxpose.xlu0.b32.cont [4/16] 0.0, 128
        %585 = vxpose.xlu0.b32.cont [5/16] 0.0, 128
        %586 = vxpose.xlu0.b32.cont [6/16] 0.0, 128
        %587 = vxpose.xlu0.b32.cont [7/16] 0.0, 128
        %588 = vxpose.xlu0.b32.cont [8/16] 0.0, 128
        %589 = vxpose.xlu0.b32.cont [9/16] 0.0, 128
        %590 = vxpose.xlu0.b32.cont [10/16] 0.0, 128
        %591 = vxpose.xlu0.b32.cont [11/16] 0.0, 128
        %592 = vxpose.xlu0.b32.cont [12/16] 0.0, 128
        %593 = vxpose.xlu0.b32.cont [13/16] 0.0, 128
        %594 = vxpose.xlu0.b32.cont [14/16] 0.0, 128
        %595 = vxpose.xlu0.b32.cont [15/16] 0.0, 128
        %596 = vxpose.xlu0.b32.end [16/16] 0.0, 128
        %v597 = vpop.trf.xlu0
        %v598 = vpop.trf.xlu0
        %v599 = vpop.trf.xlu0
        %v600 = vpop.trf.xlu0
        %v601 = vpop.trf.xlu0
        %v602 = vpop.trf.xlu0
        %v603 = vpop.trf.xlu0
        %v604 = vpop.trf.xlu0
        %v605 = vpop.trf.xlu0
        %v606 = vpop.trf.xlu0
        %v607 = vpop.trf.xlu0
        %v608 = vpop.trf.xlu0
        %v609 = vpop.trf.xlu0
        %v610 = vpop.trf.xlu0
        %v611 = vpop.trf.xlu0
        %v612 = vpop.trf.xlu0
        %vm613 = vcmask 64512
        %v615 = vsel %vm613, %v597, 0
        %v618 = vsel %vm613, %v598, 0
        %620 = vmatprep.subr.mxu0 0.0
        %621 = vmatpush1.msra.mxu0 %v321
        %622 = vmatprep.subr.mxu0 0.0
        %623 = vmatpush1.msra.mxu0 0.0
        %624 = vmatprep.subr.mxu0 0.0
        %625 = vmatpush1.msra.mxu0 0.0
        %626 = vmatprep.subr.mxu0 0.0
        %627 = vmatpush1.msra.mxu0 0.0
        %628 = vmatprep.subr.mxu0 0.0
        %629 = vmatpush1.msra.mxu0 0.0
        %630 = vmatprep.subr.mxu0 0.0
        %631 = vmatpush1.msra.mxu0 0.0
        %632 = vmatprep.subr.mxu0 0.0
        %633 = vmatpush1.msra.mxu0 0.0
        %634 = vmatprep.subr.mxu0 0.0
        %635 = vmatpush1.msra.mxu0 0.0
        %636 = vmatprep.subr.mxu0 0.0
        %637 = vmatpush1.msra.mxu0 0.0
        %638 = vmatprep.subr.mxu0 0.0
        %639 = vmatpush1.msra.mxu0 0.0
        %640 = vmatprep.subr.mxu0 0.0
        %641 = vmatpush1.msra.mxu0 0.0
        %642 = vmatprep.subr.mxu0 0.0
        %643 = vmatpush1.msra.mxu0 0.0
        %644 = vmatprep.subr.mxu0 0.0
        %645 = vmatpush1.msra.mxu0 0.0
        %646 = vmatprep.subr.mxu0 0.0
        %647 = vmatpush1.msra.mxu0 0.0
        %648 = vmatprep.subr.mxu0 0.0
        %649 = vmatpush1.msra.mxu0 0.0
        %650 = vmatprep.subr.mxu0 0.0
        %651 = vmatpush1.msra.mxu0 0.0
        %652 = vmatprep.subr.mxu0 0.0
        %653 = vmatpush1.msra.mxu0 0.0
        %654 = vmatprep.subr.mxu0 0.0
        %655 = vmatpush1.msra.mxu0 0.0
        %656 = vmatprep.subr.mxu0 0.0
        %657 = vmatpush1.msra.mxu0 0.0
        %658 = vmatprep.subr.mxu0 0.0
        %659 = vmatpush1.msra.mxu0 0.0
        %660 = vmatprep.subr.mxu0 0.0
        %661 = vmatpush1.msra.mxu0 0.0
        %662 = vmatprep.subr.mxu0 0.0
        %663 = vmatpush1.msra.mxu0 0.0
        %664 = vmatprep.subr.mxu0 0.0
        %665 = vmatpush1.msra.mxu0 0.0
        %666 = vmatprep.subr.mxu0 0.0
        %667 = vmatpush1.msra.mxu0 0.0
        %668 = vmatprep.subr.mxu0 0.0
        %669 = vmatpush1.msra.mxu0 0.0
        %670 = vmatprep.subr.mxu0 0.0
        %671 = vmatpush1.msra.mxu0 0.0
        %672 = vmatprep.subr.mxu0 0.0
        %673 = vmatpush1.msra.mxu0 0.0
        %674 = vmatprep.subr.mxu0 0.0
        %675 = vmatpush1.msra.mxu0 0.0
        %676 = vmatprep.subr.mxu0 0.0
        %677 = vmatpush1.msra.mxu0 0.0
        %678 = vmatprep.subr.mxu0 0.0
        %679 = vmatpush1.msra.mxu0 0.0
        %680 = vmatprep.subr.mxu0 0.0
        %681 = vmatpush1.msra.mxu0 0.0
        %682 = vmatprep.subr.mxu0 0.0
        %683 = vmatpush1.msra.mxu0 0.0
        %684 = vmatprep.mubr.f32.mxu0 0.0
        %685 = vmatmul.mubr.f32.gmra.mrb[0].mxu0 %v615
        %v686 = vpop.f32.mrb[0].mxu0
        %v687 = vadd.f32 0.0, %v686
        %v688 = vpop.f32.mrb[0].mxu0
        %689 = vmatprep.mubr.f32.mxu0 0.0
        %690 = vmatmul.mubr.f32.gmra.mrb[0].mxu0 %v618
        %v691 = vpop.f32.mrb[0].mxu0
        %v692 = vadd.f32 0.0, %v691
        %v693 = vpop.f32.mrb[0].mxu0
        %694 = vdwg.mxu0
        %695 = vxpose.xlu0.b32.start [1/16] %v560, 128
        %696 = vxpose.xlu0.b32.cont [2/16] 0.0, 128
        %697 = vxpose.xlu0.b32.cont [3/16] 0.0, 128
        %698 = vxpose.xlu0.b32.cont [4/16] 0.0, 128
        %699 = vxpose.xlu0.b32.cont [5/16] 0.0, 128
        %700 = vxpose.xlu0.b32.cont [6/16] 0.0, 128
        %701 = vxpose.xlu0.b32.cont [7/16] 0.0, 128
        %702 = vxpose.xlu0.b32.cont [8/16] 0.0, 128
        %703 = vxpose.xlu0.b32.cont [9/16] 0.0, 128
        %704 = vxpose.xlu0.b32.cont [10/16] 0.0, 128
        %705 = vxpose.xlu0.b32.cont [11/16] 0.0, 128
        %706 = vxpose.xlu0.b32.cont [12/16] 0.0, 128
        %707 = vxpose.xlu0.b32.cont [13/16] 0.0, 128
        %708 = vxpose.xlu0.b32.cont [14/16] 0.0, 128
        %709 = vxpose.xlu0.b32.cont [15/16] 0.0, 128
        %710 = vxpose.xlu0.b32.end [16/16] 0.0, 128
        %v711 = vpop.trf.xlu0
        %v712 = vpop.trf.xlu0
        %v713 = vpop.trf.xlu0
        %v714 = vpop.trf.xlu0
        %v715 = vpop.trf.xlu0
        %v716 = vpop.trf.xlu0
        %v717 = vpop.trf.xlu0
        %v718 = vpop.trf.xlu0
        %v719 = vpop.trf.xlu0
        %v720 = vpop.trf.xlu0
        %v721 = vpop.trf.xlu0
        %v722 = vpop.trf.xlu0
        %v723 = vpop.trf.xlu0
        %v724 = vpop.trf.xlu0
        %v725 = vpop.trf.xlu0
        %v726 = vpop.trf.xlu0
        %v728 = vsel %vm613, %v711, 0
        %v731 = vsel %vm613, %v712, 0
        %733 = vmatprep.subr.mxu0 0.0
        %734 = vmatpush1.msra.mxu0 %v322
        %735 = vmatprep.subr.mxu0 0.0
        %736 = vmatpush1.msra.mxu0 0.0
        %737 = vmatprep.subr.mxu0 0.0
        %738 = vmatpush1.msra.mxu0 0.0
        %739 = vmatprep.subr.mxu0 0.0
        %740 = vmatpush1.msra.mxu0 0.0
        %741 = vmatprep.subr.mxu0 0.0
        %742 = vmatpush1.msra.mxu0 0.0
        %743 = vmatprep.subr.mxu0 0.0
        %744 = vmatpush1.msra.mxu0 0.0
        %745 = vmatprep.subr.mxu0 0.0
        %746 = vmatpush1.msra.mxu0 0.0
        %747 = vmatprep.subr.mxu0 0.0
        %748 = vmatpush1.msra.mxu0 0.0
        %749 = vmatprep.subr.mxu0 0.0
        %750 = vmatpush1.msra.mxu0 0.0
        %751 = vmatprep.subr.mxu0 0.0
        %752 = vmatpush1.msra.mxu0 0.0
        %753 = vmatprep.subr.mxu0 0.0
        %754 = vmatpush1.msra.mxu0 0.0
        %755 = vmatprep.subr.mxu0 0.0
        %756 = vmatpush1.msra.mxu0 0.0
        %757 = vmatprep.subr.mxu0 0.0
        %758 = vmatpush1.msra.mxu0 0.0
        %759 = vmatprep.subr.mxu0 0.0
        %760 = vmatpush1.msra.mxu0 0.0
        %761 = vmatprep.subr.mxu0 0.0
        %762 = vmatpush1.msra.mxu0 0.0
        %763 = vmatprep.subr.mxu0 0.0
        %764 = vmatpush1.msra.mxu0 0.0
        %765 = vmatprep.subr.mxu0 0.0
        %766 = vmatpush1.msra.mxu0 0.0
        %767 = vmatprep.subr.mxu0 0.0
        %768 = vmatpush1.msra.mxu0 0.0
        %769 = vmatprep.subr.mxu0 0.0
        %770 = vmatpush1.msra.mxu0 0.0
        %771 = vmatprep.subr.mxu0 0.0
        %772 = vmatpush1.msra.mxu0 0.0
        %773 = vmatprep.subr.mxu0 0.0
        %774 = vmatpush1.msra.mxu0 0.0
        %775 = vmatprep.subr.mxu0 0.0
        %776 = vmatpush1.msra.mxu0 0.0
        %777 = vmatprep.subr.mxu0 0.0
        %778 = vmatpush1.msra.mxu0 0.0
        %779 = vmatprep.subr.mxu0 0.0
        %780 = vmatpush1.msra.mxu0 0.0
        %781 = vmatprep.subr.mxu0 0.0
        %782 = vmatpush1.msra.mxu0 0.0
        %783 = vmatprep.subr.mxu0 0.0
        %784 = vmatpush1.msra.mxu0 0.0
        %785 = vmatprep.subr.mxu0 0.0
        %786 = vmatpush1.msra.mxu0 0.0
        %787 = vmatprep.subr.mxu0 0.0
        %788 = vmatpush1.msra.mxu0 0.0
        %789 = vmatprep.subr.mxu0 0.0
        %790 = vmatpush1.msra.mxu0 0.0
        %791 = vmatprep.subr.mxu0 0.0
        %792 = vmatpush1.msra.mxu0 0.0
        %793 = vmatprep.subr.mxu0 0.0
        %794 = vmatpush1.msra.mxu0 0.0
        %795 = vmatprep.subr.mxu0 0.0
        %796 = vmatpush1.msra.mxu0 0.0
        %797 = vmatprep.mubr.f32.mxu0 0.0
        %798 = vmatmul.mubr.f32.gmra.mrb[0].mxu0 %v728
        %v799 = vpop.f32.mrb[0].mxu0
        %v800 = vadd.f32 0.0, %v799
        %v801 = vpop.f32.mrb[0].mxu0
        %802 = vmatprep.mubr.f32.mxu0 0.0
        %803 = vmatmul.mubr.f32.gmra.mrb[0].mxu0 %v731
        %v804 = vpop.f32.mrb[0].mxu0
        %v805 = vadd.f32 0.0, %v804
        %v806 = vpop.f32.mrb[0].mxu0
        %807 = vdwg.mxu0
        %v809 = vsel %vm522, %v578, 0
        %811 = vmatprep.subr.mxu0 0.0
        %812 = vmatpush1.msra.mxu0 %v323
        %813 = vmatprep.subr.mxu0 0.0
        %814 = vmatpush1.msra.mxu0 %v324
        %815 = vmatprep.subr.mxu0 0.0
        %816 = vmatpush1.msra.mxu0 0.0
        %817 = vmatprep.subr.mxu0 0.0
        %818 = vmatpush1.msra.mxu0 0.0
        %819 = vmatprep.subr.mxu0 0.0
        %820 = vmatpush1.msra.mxu0 0.0
        %821 = vmatprep.subr.mxu0 0.0
        %822 = vmatpush1.msra.mxu0 0.0
        %823 = vmatprep.subr.mxu0 0.0
        %824 = vmatpush1.msra.mxu0 0.0
        %825 = vmatprep.subr.mxu0 0.0
        %826 = vmatpush1.msra.mxu0 0.0
        %827 = vmatprep.subr.mxu0 0.0
        %828 = vmatpush1.msra.mxu0 0.0
        %829 = vmatprep.subr.mxu0 0.0
        %830 = vmatpush1.msra.mxu0 0.0
        %831 = vmatprep.subr.mxu0 0.0
        %832 = vmatpush1.msra.mxu0 0.0
        %833 = vmatprep.subr.mxu0 0.0
        %834 = vmatpush1.msra.mxu0 0.0
        %835 = vmatprep.subr.mxu0 0.0
        %836 = vmatpush1.msra.mxu0 0.0
        %837 = vmatprep.subr.mxu0 0.0
        %838 = vmatpush1.msra.mxu0 0.0
        %839 = vmatprep.subr.mxu0 0.0
        %840 = vmatpush1.msra.mxu0 0.0
        %841 = vmatprep.subr.mxu0 0.0
        %842 = vmatpush1.msra.mxu0 0.0
        %843 = vmatprep.subr.mxu0 0.0
        %844 = vmatpush1.msra.mxu0 0.0
        %845 = vmatprep.subr.mxu0 0.0
        %846 = vmatpush1.msra.mxu0 0.0
        %847 = vmatprep.subr.mxu0 0.0
        %848 = vmatpush1.msra.mxu0 0.0
        %849 = vmatprep.subr.mxu0 0.0
        %850 = vmatpush1.msra.mxu0 0.0
        %851 = vmatprep.subr.mxu0 0.0
        %852 = vmatpush1.msra.mxu0 0.0
        %853 = vmatprep.subr.mxu0 0.0
        %854 = vmatpush1.msra.mxu0 0.0
        %855 = vmatprep.subr.mxu0 0.0
        %856 = vmatpush1.msra.mxu0 0.0
        %857 = vmatprep.subr.mxu0 0.0
        %858 = vmatpush1.msra.mxu0 0.0
        %859 = vmatprep.subr.mxu0 0.0
        %860 = vmatpush1.msra.mxu0 0.0
        %861 = vmatprep.subr.mxu0 0.0
        %862 = vmatpush1.msra.mxu0 0.0
        %863 = vmatprep.subr.mxu0 0.0
        %864 = vmatpush1.msra.mxu0 0.0
        %865 = vmatprep.subr.mxu0 0.0
        %866 = vmatpush1.msra.mxu0 0.0
        %867 = vmatprep.subr.mxu0 0.0
        %868 = vmatpush1.msra.mxu0 0.0
        %869 = vmatprep.subr.mxu0 0.0
        %870 = vmatpush1.msra.mxu0 0.0
        %871 = vmatprep.subr.mxu0 0.0
        %872 = vmatpush1.msra.mxu0 0.0
        %873 = vmatprep.subr.mxu0 0.0
        %874 = vmatpush1.msra.mxu0 0.0
        %875 = vmatprep.mubr.f32.mxu0 0.0
        %876 = vmatmul.mubr.f32.gmra.mrb[0].mxu0 %v809
        %v877 = vpop.f32.mrb[0].mxu0
        %v878 = vadd.f32 0.0, %v877
        %v879 = vpop.f32.mrb[0].mxu0
        %880 = vdwg.mxu0
        %v882 = vsel %vm522, %v580, 0
        %884 = vmatprep.subr.mxu0 0.0
        %885 = vmatpush1.msra.mxu0 %v325
        %886 = vmatprep.subr.mxu0 0.0
        %887 = vmatpush1.msra.mxu0 %v326
        %888 = vmatprep.subr.mxu0 0.0
        %889 = vmatpush1.msra.mxu0 0.0
        %890 = vmatprep.subr.mxu0 0.0
        %891 = vmatpush1.msra.mxu0 0.0
        %892 = vmatprep.subr.mxu0 0.0
        %893 = vmatpush1.msra.mxu0 0.0
        %894 = vmatprep.subr.mxu0 0.0
        %895 = vmatpush1.msra.mxu0 0.0
        %896 = vmatprep.subr.mxu0 0.0
        %897 = vmatpush1.msra.mxu0 0.0
        %898 = vmatprep.subr.mxu0 0.0
        %899 = vmatpush1.msra.mxu0 0.0
        %900 = vmatprep.subr.mxu0 0.0
        %901 = vmatpush1.msra.mxu0 0.0
        %902 = vmatprep.subr.mxu0 0.0
        %903 = vmatpush1.msra.mxu0 0.0
        %904 = vmatprep.subr.mxu0 0.0
        %905 = vmatpush1.msra.mxu0 0.0
        %906 = vmatprep.subr.mxu0 0.0
        %907 = vmatpush1.msra.mxu0 0.0
        %908 = vmatprep.subr.mxu0 0.0
        %909 = vmatpush1.msra.mxu0 0.0
        %910 = vmatprep.subr.mxu0 0.0
        %911 = vmatpush1.msra.mxu0 0.0
        %912 = vmatprep.subr.mxu0 0.0
        %913 = vmatpush1.msra.mxu0 0.0
        %914 = vmatprep.subr.mxu0 0.0
        %915 = vmatpush1.msra.mxu0 0.0
        %916 = vmatprep.subr.mxu0 0.0
        %917 = vmatpush1.msra.mxu0 0.0
        %918 = vmatprep.subr.mxu0 0.0
        %919 = vmatpush1.msra.mxu0 0.0
        %920 = vmatprep.subr.mxu0 0.0
        %921 = vmatpush1.msra.mxu0 0.0
        %922 = vmatprep.subr.mxu0 0.0
        %923 = vmatpush1.msra.mxu0 0.0
        %924 = vmatprep.subr.mxu0 0.0
        %925 = vmatpush1.msra.mxu0 0.0
        %926 = vmatprep.subr.mxu0 0.0
        %927 = vmatpush1.msra.mxu0 0.0
        %928 = vmatprep.subr.mxu0 0.0
        %929 = vmatpush1.msra.mxu0 0.0
        %930 = vmatprep.subr.mxu0 0.0
        %931 = vmatpush1.msra.mxu0 0.0
        %932 = vmatprep.subr.mxu0 0.0
        %933 = vmatpush1.msra.mxu0 0.0
        %934 = vmatprep.subr.mxu0 0.0
        %935 = vmatpush1.msra.mxu0 0.0
        %936 = vmatprep.subr.mxu0 0.0
        %937 = vmatpush1.msra.mxu0 0.0
        %938 = vmatprep.subr.mxu0 0.0
        %939 = vmatpush1.msra.mxu0 0.0
        %940 = vmatprep.subr.mxu0 0.0
        %941 = vmatpush1.msra.mxu0 0.0
        %942 = vmatprep.subr.mxu0 0.0
        %943 = vmatpush1.msra.mxu0 0.0
        %944 = vmatprep.subr.mxu0 0.0
        %945 = vmatpush1.msra.mxu0 0.0
        %946 = vmatprep.subr.mxu0 0.0
        %947 = vmatpush1.msra.mxu0 0.0
        %948 = vmatprep.mubr.f32.mxu0 0.0
        %949 = vmatmul.mubr.f32.gmra.mrb[0].mxu0 %v882
        %v950 = vpop.f32.mrb[0].mxu0
        %v951 = vadd.f32 0.0, %v950
        %v952 = vpop.f32.mrb[0].mxu0
        %953 = vdwg.mxu0
        %954 = vst.msk [vmem:[%s293] sm:$0xff] %vm333, %v878
        %955 = vst.msk [vmem:[%s293 + $0x8] sm:$0xff] %vm333, %v951
        %956 = vst.msk [vmem:[%s300] sm:$0xff] %vm333, %v687
        %957 = vst.msk [vmem:[%s300 + $0x8] sm:$0xff] %vm333, %v692
        %958 = vst.msk [vmem:[%s300 + $0x10] sm:$0xff] %vm333, %v800
        %959 = vst.msk [vmem:[%s300 + $0x18] sm:$0xff] %vm333, %v805
        %s960 = sand.u32 %s138, 1
        %s961 = scalar_lea.sflag [#allocation4], %s960
        %s962 = sand.u32 %s138, 1
        %s963 = smul.addr %s962, 16
        %s964 = scalar_lea.vmem [#allocation5], %s963
        %s965 = sand.u32 %s164, 1
        %s966 = scalar_lea.sflag [#allocation7], %s965
        %s967 = sand.u32 %s164, 1
        %s968 = smul.addr %s967, 32
        %s969 = scalar_lea.vmem [#allocation6], %s968
        // Predicated region
        $region41: #{tpu_custom_call.1} parent=35 // pred_check
          %p970 = pneg %p148
        $region42: #{tpu_custom_call.1} parent=35 // pred_check_branch
          %972 = sbr.rel (%p970) target = $region44
        $region43: #{tpu_custom_call.1} parent=35 // pred_region
          %s973 = smul.u32 2, %s26
          %s975 = ssub.s32 256, 256
          %976 = vsyncadd %s961, %s975
          %s977 = smul.addr %s973, 128
          %s978 = scalar_lea.hbm %s4, %s977
          %s979 = sshll.u32 %s964, 4
          %s980 = int_to_ptr.vmem [resolvable:$true] %s979
          %985 = dma.vmem_to_hbm [thread:$0]  %s980, 256, %s978, %s961, 128, 128, 8
        $region44: #{tpu_custom_call.1} parent=35 // pred_fallthru
          _
        // Predicated region
        $region45: #{tpu_custom_call.1} parent=35 // pred_check
          %p986 = pneg %p174
        $region46: #{tpu_custom_call.1} parent=35 // pred_check_branch
          %988 = sbr.rel (%p986) target = $region48
        $region47: #{tpu_custom_call.1} parent=35 // pred_region
          %s989 = smul.u32 2, %s26
          %s991 = ssub.s32 512, 512
          %992 = vsyncadd %s966, %s991
          %s993 = smul.addr %s989, 2
          %s994 = smul.addr %s993, 128
          %s995 = scalar_lea.hbm %s5, %s994
          %s996 = sshll.u32 %s969, 4
          %s997 = int_to_ptr.vmem [resolvable:$true] %s996
          %1002 = dma.vmem_to_hbm [thread:$0]  %s997, 512, %s995, %s966, 128, 128, 8
        $region48: #{tpu_custom_call.1} parent=35 // pred_fallthru
          _
      $region36: #{tpu_custom_call.1} parent=5 // pred_fallthru
        _
      %p1003 = scmp.le.s32.totalorder 2, %s21
      // Predicated region
      $region49: #{tpu_custom_call.1} parent=5 // pred_check
        %p1004 = pneg %p1003
      $region50: #{tpu_custom_call.1} parent=5 // pred_check_branch
        %1006 = sbr.rel (%p1004) target = $region52
      $region51: #{tpu_custom_call.1} parent=5 // pred_region
        %s1007 = ssub.s32 %s21, 2
        // Predicated region
        $region53: #{tpu_custom_call.1} parent=51 // pred_check
          %p1008 = pneg %p154
        $region54: #{tpu_custom_call.1} parent=51 // pred_check_branch
          %1010 = sbr.rel (%p1008) target = $region56
        $region55: #{tpu_custom_call.1} parent=51 // pred_region
          %s1011 = sand.u32 %s139, 1
          %s1012 = scalar_lea.sflag [#allocation4], %s1011
          %s1013 = sand.u32 %s139, 1
          %s1014 = smul.addr %s1013, 16
          %s1015 = scalar_lea.vmem [#allocation5], %s1014
          %1016 = dma.done %s1012, 256
        $region56: #{tpu_custom_call.1} parent=51 // pred_fallthru
          _
        // Predicated region
        $region57: #{tpu_custom_call.1} parent=51 // pred_check
          %p1017 = pneg %p180
        $region58: #{tpu_custom_call.1} parent=51 // pred_check_branch
          %1019 = sbr.rel (%p1017) target = $region60
        $region59: #{tpu_custom_call.1} parent=51 // pred_region
          %s1020 = sand.u32 %s165, 1
          %s1021 = scalar_lea.sflag [#allocation7], %s1020
          %s1022 = sand.u32 %s165, 1
          %s1023 = smul.addr %s1022, 32
          %s1024 = scalar_lea.vmem [#allocation6], %s1023
          %1025 = dma.done %s1021, 512
        $region60: #{tpu_custom_call.1} parent=51 // pred_fallthru
          _
      $region52: #{tpu_custom_call.1} parent=5 // pred_fallthru
        _
    $region6: #{tpu_custom_call.1} parent=1 // loop_footer
      %s25 = sadd.s32 1, %s21
    $region7: #{tpu_custom_call.1} parent=1 // loop_footer_branch
      %20 = sbr.rel target = $region3
    $region8: #{tpu_custom_call.1} parent=1 // loop_exit
      _
    %1026 = vsyncpa [#allocation3], 1
    %s1027 = scalar_lea.sflag [#allocation3], 1
    %1028 = vsyncpa %s1027, 1
    %1029 = vsyncpa [#allocation4], 1
    %s1030 = scalar_lea.sflag [#allocation4], 1
    %1031 = vsyncpa %s1030, 1
    %1032 = vsyncpa [#allocation7], 1
    %s1033 = scalar_lea.sflag [#allocation7], 1
    %1034 = vsyncpa %s1033, 1

</llo_original>
